<compile_context>
chip_gen: v7x
topology: tpu7x:2x2x1
jax: 0.10.0
libtpu: 0.0.40
codegen_flags: <defaults>
</compile_context>

<pallas_src>
import jax
import jax.numpy as jnp
from jax.experimental import pallas as pl
from jax.experimental.pallas import tpu as pltpu


def _rotary4d_kernel(pos_ref, invf_ref, x_ref, out_ref):
    # pos_ref : (TILE, num_dims)  int32 positions per axis
    # invf_ref: (1, D//2)         f32, inv_freq tiled per axis:
    #                             invf[0, a*nfreq + k] == inv_freq[k]
    # x_ref   : (TILE, D)
    # out_ref : (TILE, D)
    tile, num_dims = pos_ref.shape
    d2 = invf_ref.shape[1]
    nfreq = d2 // num_dims

    pos = pos_ref[...].astype(jnp.float32)                 # (TILE, num_dims)

    if nfreq % 128 == 0:
        # Lane-aligned production path: per-axis blocks, no concatenates,
        # direct slab stores.  Live f32 temporaries are only (TILE, nfreq).
        for a in range(num_dims):
            lo = a * nfreq
            hi = lo + nfreq
            theta = pos[:, a:a + 1] * invf_ref[:, lo:hi]    # (TILE, nfreq) exact f32
            cos_t = jnp.cos(theta)
            sin_t = jnp.sin(theta)
            x1a = x_ref[:, lo:hi].astype(jnp.float32)
            x2a = x_ref[:, d2 + lo:d2 + hi].astype(jnp.float32)
            out_ref[:, lo:hi] = (x1a * cos_t - x2a * sin_t).astype(out_ref.dtype)
            out_ref[:, d2 + lo:d2 + hi] = (x1a * sin_t + x2a * cos_t).astype(out_ref.dtype)
    else:
        # Fallback for small / lane-unaligned dims: keep everything full-width
        # so every load/store is a single dense slab (proven-working path).
        pos_exp = jnp.concatenate(
            [jnp.broadcast_to(pos[:, a:a + 1], (tile, nfreq))
             for a in range(num_dims)], axis=-1)            # (TILE, D/2)
        theta = pos_exp * invf_ref[...]
        cos_t = jnp.cos(theta)
        sin_t = jnp.sin(theta)
        x = x_ref[...].astype(jnp.float32)
        x1 = x[:, :d2]
        x2 = x[:, d2:]
        out_ref[...] = jnp.concatenate(
            [x1 * cos_t - x2 * sin_t, x1 * sin_t + x2 * cos_t],
            axis=-1).astype(out_ref.dtype)


def _max_tile_rows(D, itemsize, budget_bytes=24 * 1024 * 1024, cap=1024):
    """Largest row tile (multiple of 8, <= cap) whose double-buffered in+out
    blocks plus in-kernel f32 temporaries fit the VMEM block budget."""
    per_row = 2 * 2 * D * itemsize + 4 * D          # dbl-buffered x+out blocks + temps
    t = max(8, min(cap, budget_bytes // per_row))
    return (t // 8) * 8


def rotary4d_pallas(x, pos, inv_freq, num_dims=4, donate_x=False):
    """x: (B, S, D); pos: (B, S, num_dims) int; inv_freq: (D // (2*num_dims),)."""
    B, S, D = x.shape
    assert D % (num_dims * 2) == 0, "Embedding dim must be divisible by num_dims*2"
    assert pos.shape == (B, S, num_dims), "pos shape mismatch"
    d2 = D // 2
    nfreq = d2 // num_dims
    assert inv_freq.shape == (nfreq,)
    # NOTE: positions are cast to f32 in-kernel; values >= 2^24 would lose
    # integer precision (fine for realistic sequence/grid positions).

    rows = B * S
    x2d = x.reshape(rows, D)
    pos2d = pos.reshape(rows, num_dims).astype(jnp.int32)

    # inv_freq tiled once per axis -> (1, D/2); stays VMEM-resident (index 0,0).
    invf_row = jnp.tile(inv_freq.astype(jnp.float32), num_dims).reshape(1, d2)

    itemsize = jnp.dtype(x.dtype).itemsize
    max_tile = _max_tile_rows(D, itemsize)

    if rows <= max_tile:
        tile, pad = rows, 0                          # single full-extent block
    else:
        # Prefer a multiple-of-8 divisor of rows: no jnp.pad -> no extra full
        # HBM read+write of x before the kernel runs.
        tile = next((t for t in range(max_tile, 7, -8) if rows % t == 0), 0)
        if tile:
            pad = 0
        else:                                        # pathological row count
            tile = max_tile
            pad = (-rows) % tile
            x2d = jnp.pad(x2d, ((0, pad), (0, 0)))
            pos2d = jnp.pad(pos2d, ((0, pad), (0, 0)))
    total = rows + pad

    call_kwargs = {}
    if donate_x:
        call_kwargs["input_output_aliases"] = {2: 0}  # x2d is operand index 2

    out2d = pl.pallas_call(
        _rotary4d_kernel,
        out_shape=jax.ShapeDtypeStruct((total, D), x.dtype),
        grid_spec=pltpu.PrefetchScalarGridSpec(
            num_scalar_prefetch=0,
            grid=(total // tile,),
            in_specs=[
                pl.BlockSpec((tile, num_dims), lambda i: (i, 0)),
                pl.BlockSpec((1, d2), lambda i: (0, 0)),
                pl.BlockSpec((tile, D), lambda i: (i, 0)),
            ],
            out_specs=pl.BlockSpec((tile, D), lambda i: (i, 0)),
        ),
        compiler_params=pltpu.CompilerParams(
            dimension_semantics=("parallel",),
            vmem_limit_bytes=40 * 1024 * 1024,
        ),
        **call_kwargs,
    )(pos2d, invf_row, x2d)

    if pad:
        out2d = out2d[:rows]
    return out2d.reshape(B, S, D)


def rotary4d_ref(x, pos, inv_freq, num_dims=4):
    """Pure-JAX reference of the PyTorch Rotary4D.forward."""
    B, S, D = x.shape
    freqs = []
    for a in range(num_dims):
        pa = pos[:, :, a].astype(jnp.float32)                # (B, S)
        freqs.append(pa[:, :, None] * inv_freq[None, None, :])
    cos_emb = jnp.concatenate([jnp.cos(f) for f in freqs], axis=-1)
    sin_emb = jnp.concatenate([jnp.sin(f) for f in freqs], axis=-1)
    x1, x2 = x[..., :D // 2], x[..., D // 2:]
    return jnp.concatenate([x1 * cos_emb - x2 * sin_emb,
                            x1 * sin_emb + x2 * cos_emb], axis=-1)


def _make_inv_freq(dim, num_dims, base=10000.0):
    dim_per_axis = dim // num_dims
    return 1.0 / (base ** (jnp.arange(0, dim_per_axis, 2, dtype=jnp.float32)
                           / dim_per_axis))


if __name__ == "__main__":
    key = jax.random.PRNGKey(0)

    # Case 1: small dims (D=32) -> exercises the full-width fallback path.
    B, S, D, ND = 2, 8, 32, 4
    k1, k2, k3, k4 = jax.random.split(key, 4)
    x_small = jax.random.normal(k1, (B, S, D), dtype=jnp.float32)
    pos_small = jax.random.randint(k2, (B, S, ND), 0, 64, dtype=jnp.int32)
    invf_small = _make_inv_freq(D, ND)

    out_small = jax.block_until_ready(rotary4d_pallas(x_small, pos_small, invf_small, num_dims=ND))
    ref_small = jax.block_until_ready(rotary4d_ref(x_small, pos_small, invf_small, num_dims=ND))
    assert out_small.shape == (B, S, D)
    assert jnp.allclose(out_small, ref_small, atol=2e-3, rtol=2e-3), "small-dim mismatch"

    # Case 2: lane-aligned dims (D=1024, nfreq=128) -> exercises the optimized
    # per-axis slab-store path.
    D2 = 1024
    x_big = jax.random.normal(k3, (B, S, D2), dtype=jnp.float32)
    pos_big = jax.random.randint(k4, (B, S, ND), 0, 64, dtype=jnp.int32)
    invf_big = _make_inv_freq(D2, ND)

    out_big = jax.block_until_ready(rotary4d_pallas(x_big, pos_big, invf_big, num_dims=ND))
    ref_big = jax.block_until_ready(rotary4d_ref(x_big, pos_big, invf_big, num_dims=ND))
    assert out_big.shape == (B, S, D2)
    assert jnp.allclose(out_big, ref_big, atol=2e-3, rtol=2e-3), "aligned-dim mismatch"

    print("KERNEL_OK")
</pallas_src>

<mosaic_0001>
module attributes {stable_mosaic.version = 11 : i64} {
  func.func @_rotary4d_kernel(%arg0: i32, %arg1: memref<16x4xi32, #tpu.memory_space<vmem>>, %arg2: memref<1x16xf32, #tpu.memory_space<vmem>>, %arg3: memref<16x32xf32, #tpu.memory_space<vmem>>, %arg4: memref<16x32xf32, #tpu.memory_space<vmem>>) attributes {dimension_semantics = [#tpu.dimension_semantics<parallel>], iteration_bounds = array<i64: 1>, scalar_prefetch = 0 : i64, scratch_operands = 0 : i64, tpu.core_type = #tpu.core_type<tc>, window_params = [{transform_indices = @transform_0, window_bounds = array<i64: 16, 4>}, {pipeline_mode = #tpu.pipeline_mode<synchronous>, transform_indices = @transform_1, window_bounds = array<i64: 1, 16>}, {transform_indices = @transform_2, window_bounds = array<i64: 16, 32>}, {transform_indices = @transform_3, window_bounds = array<i64: 16, 32>}]} {
    %c0 = arith.constant 0 : index
    %c0_0 = arith.constant 0 : index
    %0 = vector.load %arg1[%c0, %c0_0] : memref<16x4xi32, #tpu.memory_space<vmem>>, vector<16x4xi32>
    %1 = arith.sitofp %0 : vector<16x4xi32> to vector<16x4xf32>
    %2 = vector.extract_strided_slice %1 {offsets = [0, 0], sizes = [16, 1], strides = [1, 1]} : vector<16x4xf32> to vector<16x1xf32>
    %3 = vector.shape_cast %2 : vector<16x1xf32> to vector<16x1xf32>
    %4 = vector.broadcast %3 : vector<16x1xf32> to vector<16x4xf32>
    %5 = vector.extract_strided_slice %1 {offsets = [0, 1], sizes = [16, 1], strides = [1, 1]} : vector<16x4xf32> to vector<16x1xf32>
    %6 = vector.shape_cast %5 : vector<16x1xf32> to vector<16x1xf32>
    %7 = vector.broadcast %6 : vector<16x1xf32> to vector<16x4xf32>
    %8 = vector.extract_strided_slice %1 {offsets = [0, 2], sizes = [16, 1], strides = [1, 1]} : vector<16x4xf32> to vector<16x1xf32>
    %9 = vector.shape_cast %8 : vector<16x1xf32> to vector<16x1xf32>
    %10 = vector.broadcast %9 : vector<16x1xf32> to vector<16x4xf32>
    %11 = vector.extract_strided_slice %1 {offsets = [0, 3], sizes = [16, 1], strides = [1, 1]} : vector<16x4xf32> to vector<16x1xf32>
    %12 = vector.shape_cast %11 : vector<16x1xf32> to vector<16x1xf32>
    %13 = vector.broadcast %12 : vector<16x1xf32> to vector<16x4xf32>
    %14 = tpu.concatenate %4, %7, %10, %13 in 1 : vector<16x4xf32>, vector<16x4xf32>, vector<16x4xf32>, vector<16x4xf32> -> vector<16x16xf32>
    %c0_1 = arith.constant 0 : index
    %c0_2 = arith.constant 0 : index
    %15 = vector.load %arg2[%c0_1, %c0_2] : memref<1x16xf32, #tpu.memory_space<vmem>>, vector<1x16xf32>
    %16 = vector.broadcast %15 : vector<1x16xf32> to vector<16x16xf32>
    %17 = arith.mulf %14, %16 : vector<16x16xf32>
    %18 = math.cos %17 : vector<16x16xf32>
    %19 = math.sin %17 : vector<16x16xf32>
    %c0_3 = arith.constant 0 : index
    %c0_4 = arith.constant 0 : index
    %20 = vector.load %arg3[%c0_3, %c0_4] : memref<16x32xf32, #tpu.memory_space<vmem>>, vector<16x32xf32>
    %21 = vector.extract_strided_slice %20 {offsets = [0, 0], sizes = [16, 16], strides = [1, 1]} : vector<16x32xf32> to vector<16x16xf32>
    %22 = vector.extract_strided_slice %20 {offsets = [0, 16], sizes = [16, 16], strides = [1, 1]} : vector<16x32xf32> to vector<16x16xf32>
    %23 = arith.mulf %21, %18 : vector<16x16xf32>
    %24 = arith.mulf %22, %19 : vector<16x16xf32>
    %25 = arith.subf %23, %24 : vector<16x16xf32>
    %26 = arith.mulf %21, %19 : vector<16x16xf32>
    %27 = arith.mulf %22, %18 : vector<16x16xf32>
    %28 = arith.addf %26, %27 : vector<16x16xf32>
    %29 = tpu.concatenate %25, %28 in 1 : vector<16x16xf32>, vector<16x16xf32> -> vector<16x32xf32>
    %c0_5 = arith.constant 0 : index
    %c0_6 = arith.constant 0 : index
    %30 = vector.load %arg4[%c0_5, %c0_6] : memref<16x32xf32, #tpu.memory_space<vmem>>, vector<16x32xf32>
    tpu.vector_store %arg4[%c0_5, %c0_6], %29 {strides = array<i32>} : memref<16x32xf32, #tpu.memory_space<vmem>>, vector<16x32xf32>,
    return
  }
  func.func @transform_0(%arg0: i32) -> (i32, i32) {
    %c0_i32 = arith.constant 0 : i32
    %c0_i32_0 = arith.constant 0 : i32
    return %arg0, %c0_i32 : i32, i32
  }
  func.func @transform_1(%arg0: i32) -> (i32, i32) {
    %c0_i32 = arith.constant 0 : i32
    %c0_i32_0 = arith.constant 0 : i32
    %c0_i32_1 = arith.constant 0 : i32
    return %c0_i32, %c0_i32_0 : i32, i32
  }
  func.func @transform_2(%arg0: i32) -> (i32, i32) {
    %c0_i32 = arith.constant 0 : i32
    %c0_i32_0 = arith.constant 0 : i32
    return %arg0, %c0_i32 : i32, i32
  }
  func.func @transform_3(%arg0: i32) -> (i32, i32) {
    %c0_i32 = arith.constant 0 : i32
    %c0_i32_0 = arith.constant 0 : i32
    return %arg0, %c0_i32 : i32, i32
  }
}

</mosaic_0001>

<llo_original>
// kernel: tpu_custom_call.1
$region0: #{tpu_custom_call.1}
  #allocation0 [shape = 'u32[]', space=smem, size = 0x4, offset = 0x4, fixed_abs, tag = 'smem constant byte address 0x4 - core index']
  #allocation1 [shape = 'u32[144,128]{1,0:T(1,128)}', space=vmem, size = 0x12000, scoped, tag = 'internal scratch']
  %s0 = inlined_call_operand.vmem [shape: s32[16,4], index: 0, kind: input, shape index: {}]
  %s1 = inlined_call_operand.vmem [shape: f32[1,16], index: 1, kind: input, shape index: {}]
  %s2 = inlined_call_operand.vmem [shape: f32[16,32], index: 2, kind: input, shape index: {}]
  %s3 = inlined_call_operand.hbm [shape: f32[16,32], index: 3, kind: output, shape index: {}]
  %s4 = sld [smem:[#allocation0]]
  $region22: #{tpu_custom_call.1} parent=0
    _
  %s6 = ssub.s32 1, %s4
  %s7 = scalar_select 0, %s6, %s4
  $region1: #{tpu_custom_call.1} parent=0
    #allocation2 [shape = 'u8[8192]{0}', space=vmem, size = 0x2000, scoped, tag = 'output window, operand 0, single buffered']
    #allocation3 [shape = 's32[1]{0}', space=sflag, size = 0x4, scoped, tag = 'scoped memory for tpu_custom_call.1']
    %8 = vsyncpa [#allocation3], 0
    // Predicated region
    $region2: #{tpu_custom_call.1} parent=1 // pred_check
      _
    $region3: #{tpu_custom_call.1} parent=1 // pred_check_branch
      %10 = sbr.rel (0) target = $region5
    $region4: #{tpu_custom_call.1} parent=1 // pred_region
      _
    $region5: #{tpu_custom_call.1} parent=1 // pred_fallthru
      _
    // Predicated region
    $region6: #{tpu_custom_call.1} parent=1 // pred_check
      _
    $region7: #{tpu_custom_call.1} parent=1 // pred_check_branch
      %12 = sbr.rel (0) target = $region9
    $region8: #{tpu_custom_call.1} parent=1 // pred_region
      _
    $region9: #{tpu_custom_call.1} parent=1 // pred_fallthru
      _
    // Predicated region
    $region10: #{tpu_custom_call.1} parent=1 // pred_check
      _
    $region11: #{tpu_custom_call.1} parent=1 // pred_check_branch
      %14 = sbr.rel (0) target = $region13
    $region12: #{tpu_custom_call.1} parent=1 // pred_region
      _
    $region13: #{tpu_custom_call.1} parent=1 // pred_fallthru
      _
    %v15 = vld [vmem:[%s0] sm:$0xff]
    %v16 = vld [vmem:[%s0 + $0x8] sm:$0xff]
    %v17 = vcvt.s32.f32 %v15
    %v18 = vcvt.s32.f32 %v16
    %20 = vset.pattern.permute.xlu0 0
    %21 = vperm.xlu0 %20, %v17
    %v22 = vpop.permute.xlu0 %21
    %25 = vset.pattern.permute.xlu0 0
    %26 = vperm.xlu0 %25, %v18
    %v27 = vpop.permute.xlu0 %26
    %29 = vset.pattern.permute.xlu0 1
    %30 = vperm.xlu0 %29, %v17
    %v31 = vpop.permute.xlu0 %30
    %33 = vset.pattern.permute.xlu0 1
    %34 = vperm.xlu0 %33, %v18
    %v35 = vpop.permute.xlu0 %34
    %37 = vset.pattern.permute.xlu0 2
    %38 = vperm.xlu0 %37, %v17
    %v39 = vpop.permute.xlu0 %38
    %41 = vset.pattern.permute.xlu0 2
    %42 = vperm.xlu0 %41, %v18
    %v43 = vpop.permute.xlu0 %42
    %45 = vset.pattern.permute.xlu0 3
    %46 = vperm.xlu0 %45, %v17
    %v47 = vpop.permute.xlu0 %46
    %49 = vset.pattern.permute.xlu0 3
    %50 = vperm.xlu0 %49, %v18
    %v51 = vpop.permute.xlu0 %50
    %vm53 = vcmask 31744
    %v54 = vsel %vm53, %v22, %v31
    %v55 = vsel %vm53, %v27, %v35
    %vm56 = vcmask 64512
    %v57 = vsel %vm56, %v54, %v39
    %v58 = vsel %vm56, %v55, %v43
    %vm59 = vcmask 97280
    %v60 = vsel %vm59, %v57, %v47
    %v61 = vsel %vm59, %v58, %v51
    %v62 = vld [vmem:[%s1] sm:$0x1]
    %v64 = vlaneseq
    %v65 = vshrl.u32 %v64, 7
    %v66 = vsub.s32 0, %v65
    %v67 = vrot.slane %v62, %v66
    %v69 = vmul.f32 %v60, %v67
    %v70 = vmul.f32 %v61, %v67
    %v71 = vand.u32 2147483647, %v69
    %vm72 = vcmp.le.f32.partialorder %v71, 0.7853982
    %vm73 = vcmp.lt.s32.totalorder %v69, 0
    %v74 = vand.u32 %v69, 2139095040
    %v75 = vshrl.u32 %v74, 23
    %v76 = vsub.s32 %v75, 127
    %v77 = vand.u32 2147483647, %v69
    %v78 = vand.u32 %v77, 8388607
    %v79 = vor.u32 %v78, 8388608
    %v80 = vsub.s32 0, %v79
    %v81 = vadd.s32 %v76, 1
    %vm82 = vcmp.gt.s32.totalorder %v81, 0
    %v83 = vsel %vm82, %v81, 0
    %v84 = vshrl.u32 %v83, 5
    %v85 = vand.u32 %v83, 31
    %v86 = vsub.s32 32, %v85
    %v87 = vshrl.u32 683565275, %v86
    %v88 = vshll.u32 683565275, %v85
    %v89 = vshrl.u32 2475754826, %v86
    %v90 = vor.u32 %v88, %v89
    %v91 = vshll.u32 2475754826, %v85
    %v92 = vshrl.u32 2131351028, %v86
    %v93 = vor.u32 %v91, %v92
    %v94 = vshll.u32 2131351028, %v85
    %v95 = vshrl.u32 2102212464, %v86
    %v96 = vor.u32 %v94, %v95
    %v97 = vshll.u32 2102212464, %v85
    %v98 = vshrl.u32 920167782, %v86
    %v99 = vor.u32 %v97, %v98
    %v100 = vshll.u32 920167782, %v85
    %v101 = vshrl.u32 1326507024, %v86
    %v102 = vor.u32 %v100, %v101
    %vm103 = vcmp.lt.s32.totalorder %v84, 1
    %vm104 = vcmp.lt.s32.totalorder %v84, 2
    %vm105 = vcmp.lt.s32.totalorder %v84, 3
    %vm106 = vcmp.lt.s32.totalorder %v84, 4
    %v107 = vsel %vm103, %v87, %v90
    %v108 = vsel %vm106, %v96, 2102212464
    %v109 = vsel %vm105, %v93, %v108
    %v110 = vsel %vm104, %v107, %v109
    %v111 = vsel %vm103, %v90, %v93
    %v112 = vsel %vm106, %v99, 920167782
    %v113 = vsel %vm105, %v96, %v112
    %v114 = vsel %vm104, %v111, %v113
    %v115 = vsel %vm103, %v93, %v96
    %v116 = vsel %vm106, %v102, 1326507024
    %v117 = vsel %vm105, %v99, %v116
    %v118 = vsel %vm104, %v115, %v117
    %v119 = vshll.u32 %v79, 8
    %v120 = vmul.u32.u64.compose %v119, %v118
    %v121 = vextract.low.u32 %v120
    %v122 = vextract.high.u32 %v120
    %v123 = vmul.u32.u64.compose %v119, %v114
    %v124 = vextract.low.u32 %v123
    %v125 = vextract.high.u32 %v123
    %v126 = vmul.u32 %v119, %v110
    %v127 = vadd.s32 %v122, %v124
    %vm128 = vc.u32 %v122, %v124
    %v129 = vadd.s32 %v125, 1
    %v130 = vsel %vm128, %v129, %v125
    %v131 = vadd.s32 %v126, %v130
    %v132 = vadd.s32 %v131, 536870912
    %v133 = vshrl.u32 %v132, 30
    %v134 = vshll.u32 %v133, 30
    %v135 = vsub.s32 %v131, %v134
    %vm136 = vcmp.lt.s32.totalorder %v135, 0
    %v137 = vsub.s32 0, %v135
    %v138 = vsel %vm136, %v137, %v135
    %v139 = vclz %v138
    %v140 = vsub.s32 %v139, 2
    %vm141 = vcmp.gt.s32.totalorder 0, %v140
    %v142 = vsel %vm141, 0, %v140
    %v143 = vsub.s32 32, %v142
    %v144 = vshll.u32 %v135, %v142
    %v145 = vshrl.u32 %v127, %v143
    %v146 = vor.u32 %v144, %v145
    %v147 = vsub.s32 4294967266, %v142
    %v148 = vadd.s32 %v147, 127
    %v149 = vshll.u32 %v148, 23
    %v150 = vor.u32 4788187, %v149
    %v151 = vand.u32 2147483647, %v150
    %v153 = vcvt.s32.f32 %v146
    %v154 = vmul.f32 %v153, %v151
    %v155 = vxor.u32 %v154, 2147483648
    %v156 = vsel %vm73, %v155, %v154
    %v157 = vsub.s32 4, %v133
    %v158 = vsel %vm73, %v157, %v133
    %v159 = vsel %vm72, %v69, %v156
    %v160 = vsel %vm72, 0, %v158
    %v161 = vcosq.f32.pop %v159
    %v162 = vsinq.f32.pop %v159
    %vm163 = vweird.f32 %v69
    %v164 = vand.u32 %v160, 3
    %vm165 = vcmp.lt.s32.totalorder %v164, 2
    %vm166 = vcmp.eq.s32.totalorder %v164, 0
    %v167 = vxor.u32 %v162, 2147483648
    %v168 = vsel %vm166, %v161, %v167
    %vm169 = vcmp.eq.s32.totalorder %v164, 2
    %v170 = vxor.u32 %v161, 2147483648
    %v171 = vsel %vm169, %v170, %v162
    %v172 = vsel %vm165, %v168, %v171
    %v173 = vsel %vm163, nan, %v172
    %v174 = vand.u32 2147483647, %v70
    %vm175 = vcmp.le.f32.partialorder %v174, 0.7853982
    %vm176 = vcmp.lt.s32.totalorder %v70, 0
    %v177 = vand.u32 %v70, 2139095040
    %v178 = vshrl.u32 %v177, 23
    %v179 = vsub.s32 %v178, 127
    %v180 = vand.u32 2147483647, %v70
    %v181 = vand.u32 %v180, 8388607
    %v182 = vor.u32 %v181, 8388608
    %v183 = vsub.s32 0, %v182
    %v184 = vadd.s32 %v179, 1
    %vm185 = vcmp.gt.s32.totalorder %v184, 0
    %v186 = vsel %vm185, %v184, 0
    %v187 = vshrl.u32 %v186, 5
    %v188 = vand.u32 %v186, 31
    %v189 = vsub.s32 32, %v188
    %v190 = vshrl.u32 683565275, %v189
    %v191 = vshll.u32 683565275, %v188
    %v192 = vshrl.u32 2475754826, %v189
    %v193 = vor.u32 %v191, %v192
    %v194 = vshll.u32 2475754826, %v188
    %v195 = vshrl.u32 2131351028, %v189
    %v196 = vor.u32 %v194, %v195
    %v197 = vshll.u32 2131351028, %v188
    %v198 = vshrl.u32 2102212464, %v189
    %v199 = vor.u32 %v197, %v198
    %v200 = vshll.u32 2102212464, %v188
    %v201 = vshrl.u32 920167782, %v189
    %v202 = vor.u32 %v200, %v201
    %v203 = vshll.u32 920167782, %v188
    %v204 = vshrl.u32 1326507024, %v189
    %v205 = vor.u32 %v203, %v204
    %vm206 = vcmp.lt.s32.totalorder %v187, 1
    %vm207 = vcmp.lt.s32.totalorder %v187, 2
    %vm208 = vcmp.lt.s32.totalorder %v187, 3
    %vm209 = vcmp.lt.s32.totalorder %v187, 4
    %v210 = vsel %vm206, %v190, %v193
    %v211 = vsel %vm209, %v199, 2102212464
    %v212 = vsel %vm208, %v196, %v211
    %v213 = vsel %vm207, %v210, %v212
    %v214 = vsel %vm206, %v193, %v196
    %v215 = vsel %vm209, %v202, 920167782
    %v216 = vsel %vm208, %v199, %v215
    %v217 = vsel %vm207, %v214, %v216
    %v218 = vsel %vm206, %v196, %v199
    %v219 = vsel %vm209, %v205, 1326507024
    %v220 = vsel %vm208, %v202, %v219
    %v221 = vsel %vm207, %v218, %v220
    %v222 = vshll.u32 %v182, 8
    %v223 = vmul.u32.u64.compose %v222, %v221
    %v224 = vextract.low.u32 %v223
    %v225 = vextract.high.u32 %v223
    %v226 = vmul.u32.u64.compose %v222, %v217
    %v227 = vextract.low.u32 %v226
    %v228 = vextract.high.u32 %v226
    %v229 = vmul.u32 %v222, %v213
    %v230 = vadd.s32 %v225, %v227
    %vm231 = vc.u32 %v225, %v227
    %v232 = vadd.s32 %v228, 1
    %v233 = vsel %vm231, %v232, %v228
    %v234 = vadd.s32 %v229, %v233
    %v235 = vadd.s32 %v234, 536870912
    %v236 = vshrl.u32 %v235, 30
    %v237 = vshll.u32 %v236, 30
    %v238 = vsub.s32 %v234, %v237
    %vm239 = vcmp.lt.s32.totalorder %v238, 0
    %v240 = vsub.s32 0, %v238
    %v241 = vsel %vm239, %v240, %v238
    %v242 = vclz %v241
    %v243 = vsub.s32 %v242, 2
    %vm244 = vcmp.gt.s32.totalorder 0, %v243
    %v245 = vsel %vm244, 0, %v243
    %v246 = vsub.s32 32, %v245
    %v247 = vshll.u32 %v238, %v245
    %v248 = vshrl.u32 %v230, %v246
    %v249 = vor.u32 %v247, %v248
    %v250 = vsub.s32 4294967266, %v245
    %v251 = vadd.s32 %v250, 127
    %v252 = vshll.u32 %v251, 23
    %v253 = vor.u32 4788187, %v252
    %v254 = vand.u32 2147483647, %v253
    %v256 = vcvt.s32.f32 %v249
    %v257 = vmul.f32 %v256, %v254
    %v258 = vxor.u32 %v257, 2147483648
    %v259 = vsel %vm176, %v258, %v257
    %v260 = vsub.s32 4, %v236
    %v261 = vsel %vm176, %v260, %v236
    %v262 = vsel %vm175, %v70, %v259
    %v263 = vsel %vm175, 0, %v261
    %v264 = vcosq.f32.pop %v262
    %v265 = vsinq.f32.pop %v262
    %vm266 = vweird.f32 %v70
    %v267 = vand.u32 %v263, 3
    %vm268 = vcmp.lt.s32.totalorder %v267, 2
    %vm269 = vcmp.eq.s32.totalorder %v267, 0
    %v270 = vxor.u32 %v265, 2147483648
    %v271 = vsel %vm269, %v264, %v270
    %vm272 = vcmp.eq.s32.totalorder %v267, 2
    %v273 = vxor.u32 %v264, 2147483648
    %v274 = vsel %vm272, %v273, %v265
    %v275 = vsel %vm268, %v271, %v274
    %v276 = vsel %vm266, nan, %v275
    %v277 = vand.u32 2147483647, %v69
    %vm278 = vcmp.le.f32.partialorder %v277, 0.7853982
    %vm279 = vcmp.lt.s32.totalorder %v69, 0
    %v280 = vand.u32 %v69, 2139095040
    %v281 = vshrl.u32 %v280, 23
    %v282 = vsub.s32 %v281, 127
    %v283 = vand.u32 2147483647, %v69
    %v284 = vand.u32 %v283, 8388607
    %v285 = vor.u32 %v284, 8388608
    %v286 = vsub.s32 0, %v285
    %v287 = vadd.s32 %v282, 1
    %vm288 = vcmp.gt.s32.totalorder %v287, 0
    %v289 = vsel %vm288, %v287, 0
    %v290 = vshrl.u32 %v289, 5
    %v291 = vand.u32 %v289, 31
    %v292 = vsub.s32 32, %v291
    %v293 = vshrl.u32 683565275, %v292
    %v294 = vshll.u32 683565275, %v291
    %v295 = vshrl.u32 2475754826, %v292
    %v296 = vor.u32 %v294, %v295
    %v297 = vshll.u32 2475754826, %v291
    %v298 = vshrl.u32 2131351028, %v292
    %v299 = vor.u32 %v297, %v298
    %v300 = vshll.u32 2131351028, %v291
    %v301 = vshrl.u32 2102212464, %v292
    %v302 = vor.u32 %v300, %v301
    %v303 = vshll.u32 2102212464, %v291
    %v304 = vshrl.u32 920167782, %v292
    %v305 = vor.u32 %v303, %v304
    %v306 = vshll.u32 920167782, %v291
    %v307 = vshrl.u32 1326507024, %v292
    %v308 = vor.u32 %v306, %v307
    %vm309 = vcmp.lt.s32.totalorder %v290, 1
    %vm310 = vcmp.lt.s32.totalorder %v290, 2
    %vm311 = vcmp.lt.s32.totalorder %v290, 3
    %vm312 = vcmp.lt.s32.totalorder %v290, 4
    %v313 = vsel %vm309, %v293, %v296
    %v314 = vsel %vm312, %v302, 2102212464
    %v315 = vsel %vm311, %v299, %v314
    %v316 = vsel %vm310, %v313, %v315
    %v317 = vsel %vm309, %v296, %v299
    %v318 = vsel %vm312, %v305, 920167782
    %v319 = vsel %vm311, %v302, %v318
    %v320 = vsel %vm310, %v317, %v319
    %v321 = vsel %vm309, %v299, %v302
    %v322 = vsel %vm312, %v308, 1326507024
    %v323 = vsel %vm311, %v305, %v322
    %v324 = vsel %vm310, %v321, %v323
    %v325 = vshll.u32 %v285, 8
    %v326 = vmul.u32.u64.compose %v325, %v324
    %v327 = vextract.low.u32 %v326
    %v328 = vextract.high.u32 %v326
    %v329 = vmul.u32.u64.compose %v325, %v320
    %v330 = vextract.low.u32 %v329
    %v331 = vextract.high.u32 %v329
    %v332 = vmul.u32 %v325, %v316
    %v333 = vadd.s32 %v328, %v330
    %vm334 = vc.u32 %v328, %v330
    %v335 = vadd.s32 %v331, 1
    %v336 = vsel %vm334, %v335, %v331
    %v337 = vadd.s32 %v332, %v336
    %v338 = vadd.s32 %v337, 536870912
    %v339 = vshrl.u32 %v338, 30
    %v340 = vshll.u32 %v339, 30
    %v341 = vsub.s32 %v337, %v340
    %vm342 = vcmp.lt.s32.totalorder %v341, 0
    %v343 = vsub.s32 0, %v341
    %v344 = vsel %vm342, %v343, %v341
    %v345 = vclz %v344
    %v346 = vsub.s32 %v345, 2
    %vm347 = vcmp.gt.s32.totalorder 0, %v346
    %v348 = vsel %vm347, 0, %v346
    %v349 = vsub.s32 32, %v348
    %v350 = vshll.u32 %v341, %v348
    %v351 = vshrl.u32 %v333, %v349
    %v352 = vor.u32 %v350, %v351
    %v353 = vsub.s32 4294967266, %v348
    %v354 = vadd.s32 %v353, 127
    %v355 = vshll.u32 %v354, 23
    %v356 = vor.u32 4788187, %v355
    %v357 = vand.u32 2147483647, %v356
    %v359 = vcvt.s32.f32 %v352
    %v360 = vmul.f32 %v359, %v357
    %v361 = vxor.u32 %v360, 2147483648
    %v362 = vsel %vm279, %v361, %v360
    %v363 = vsub.s32 4, %v339
    %v364 = vsel %vm279, %v363, %v339
    %v365 = vsel %vm278, %v69, %v362
    %v366 = vsel %vm278, 0, %v364
    %v367 = vcosq.f32.pop %v365
    %v368 = vsinq.f32.pop %v365
    %vm369 = vweird.f32 %v69
    %v370 = vadd.s32 %v366, 3
    %v371 = vand.u32 %v370, 3
    %vm372 = vcmp.lt.s32.totalorder %v371, 2
    %vm373 = vcmp.eq.s32.totalorder %v371, 0
    %v374 = vxor.u32 %v368, 2147483648
    %v375 = vsel %vm373, %v367, %v374
    %vm376 = vcmp.eq.s32.totalorder %v371, 2
    %v377 = vxor.u32 %v367, 2147483648
    %v378 = vsel %vm376, %v377, %v368
    %v379 = vsel %vm372, %v375, %v378
    %v380 = vsel %vm369, nan, %v379
    %v381 = vand.u32 2147483647, %v70
    %vm382 = vcmp.le.f32.partialorder %v381, 0.7853982
    %vm383 = vcmp.lt.s32.totalorder %v70, 0
    %v384 = vand.u32 %v70, 2139095040
    %v385 = vshrl.u32 %v384, 23
    %v386 = vsub.s32 %v385, 127
    %v387 = vand.u32 2147483647, %v70
    %v388 = vand.u32 %v387, 8388607
    %v389 = vor.u32 %v388, 8388608
    %v390 = vsub.s32 0, %v389
    %v391 = vadd.s32 %v386, 1
    %vm392 = vcmp.gt.s32.totalorder %v391, 0
    %v393 = vsel %vm392, %v391, 0
    %v394 = vshrl.u32 %v393, 5
    %v395 = vand.u32 %v393, 31
    %v396 = vsub.s32 32, %v395
    %v397 = vshrl.u32 683565275, %v396
    %v398 = vshll.u32 683565275, %v395
    %v399 = vshrl.u32 2475754826, %v396
    %v400 = vor.u32 %v398, %v399
    %v401 = vshll.u32 2475754826, %v395
    %v402 = vshrl.u32 2131351028, %v396
    %v403 = vor.u32 %v401, %v402
    %v404 = vshll.u32 2131351028, %v395
    %v405 = vshrl.u32 2102212464, %v396
    %v406 = vor.u32 %v404, %v405
    %v407 = vshll.u32 2102212464, %v395
    %v408 = vshrl.u32 920167782, %v396
    %v409 = vor.u32 %v407, %v408
    %v410 = vshll.u32 920167782, %v395
    %v411 = vshrl.u32 1326507024, %v396
    %v412 = vor.u32 %v410, %v411
    %vm413 = vcmp.lt.s32.totalorder %v394, 1
    %vm414 = vcmp.lt.s32.totalorder %v394, 2
    %vm415 = vcmp.lt.s32.totalorder %v394, 3
    %vm416 = vcmp.lt.s32.totalorder %v394, 4
    %v417 = vsel %vm413, %v397, %v400
    %v418 = vsel %vm416, %v406, 2102212464
    %v419 = vsel %vm415, %v403, %v418
    %v420 = vsel %vm414, %v417, %v419
    %v421 = vsel %vm413, %v400, %v403
    %v422 = vsel %vm416, %v409, 920167782
    %v423 = vsel %vm415, %v406, %v422
    %v424 = vsel %vm414, %v421, %v423
    %v425 = vsel %vm413, %v403, %v406
    %v426 = vsel %vm416, %v412, 1326507024
    %v427 = vsel %vm415, %v409, %v426
    %v428 = vsel %vm414, %v425, %v427
    %v429 = vshll.u32 %v389, 8
    %v430 = vmul.u32.u64.compose %v429, %v428
    %v431 = vextract.low.u32 %v430
    %v432 = vextract.high.u32 %v430
    %v433 = vmul.u32.u64.compose %v429, %v424
    %v434 = vextract.low.u32 %v433
    %v435 = vextract.high.u32 %v433
    %v436 = vmul.u32 %v429, %v420
    %v437 = vadd.s32 %v432, %v434
    %vm438 = vc.u32 %v432, %v434
    %v439 = vadd.s32 %v435, 1
    %v440 = vsel %vm438, %v439, %v435
    %v441 = vadd.s32 %v436, %v440
    %v442 = vadd.s32 %v441, 536870912
    %v443 = vshrl.u32 %v442, 30
    %v444 = vshll.u32 %v443, 30
    %v445 = vsub.s32 %v441, %v444
    %vm446 = vcmp.lt.s32.totalorder %v445, 0
    %v447 = vsub.s32 0, %v445
    %v448 = vsel %vm446, %v447, %v445
    %v449 = vclz %v448
    %v450 = vsub.s32 %v449, 2
    %vm451 = vcmp.gt.s32.totalorder 0, %v450
    %v452 = vsel %vm451, 0, %v450
    %v453 = vsub.s32 32, %v452
    %v454 = vshll.u32 %v445, %v452
    %v455 = vshrl.u32 %v437, %v453
    %v456 = vor.u32 %v454, %v455
    %v457 = vsub.s32 4294967266, %v452
    %v458 = vadd.s32 %v457, 127
    %v459 = vshll.u32 %v458, 23
    %v460 = vor.u32 4788187, %v459
    %v461 = vand.u32 2147483647, %v460
    %v463 = vcvt.s32.f32 %v456
    %v464 = vmul.f32 %v463, %v461
    %v465 = vxor.u32 %v464, 2147483648
    %v466 = vsel %vm383, %v465, %v464
    %v467 = vsub.s32 4, %v443
    %v468 = vsel %vm383, %v467, %v443
    %v469 = vsel %vm382, %v70, %v466
    %v470 = vsel %vm382, 0, %v468
    %v471 = vcosq.f32.pop %v469
    %v472 = vsinq.f32.pop %v469
    %vm473 = vweird.f32 %v70
    %v474 = vadd.s32 %v470, 3
    %v475 = vand.u32 %v474, 3
    %vm476 = vcmp.lt.s32.totalorder %v475, 2
    %vm477 = vcmp.eq.s32.totalorder %v475, 0
    %v478 = vxor.u32 %v472, 2147483648
    %v479 = vsel %vm477, %v471, %v478
    %vm480 = vcmp.eq.s32.totalorder %v475, 2
    %v481 = vxor.u32 %v471, 2147483648
    %v482 = vsel %vm480, %v481, %v472
    %v483 = vsel %vm476, %v479, %v482
    %v484 = vsel %vm473, nan, %v483
    %v485 = vld [vmem:[%s2] sm:$0xff]
    %v486 = vld [vmem:[%s2 + $0x8] sm:$0xff]
    %v487 = vmul.f32 %v485, %v173
    %v488 = vmul.f32 %v486, %v276
    %491 = vrot.lane.b32.xlu0 %v380, 16
    %v492 = vpop.permute.xlu0 %491
    %493 = vrot.lane.b32.xlu0 %v484, 16
    %v494 = vpop.permute.xlu0 %493
    %v497 = vmul.f32 %v485, %v492
    %v498 = vmul.f32 %v486, %v494
    %501 = vrot.lane.b32.xlu0 %v497, 112
    %v502 = vpop.permute.xlu0 %501
    %503 = vrot.lane.b32.xlu0 %v498, 112
    %v504 = vpop.permute.xlu0 %503
    %v507 = vsub.f32 %v487, %v502
    %v508 = vsub.f32 %v488, %v504
    %v509 = vmul.f32 %v485, %v380
    %v510 = vmul.f32 %v486, %v484
    %513 = vrot.lane.b32.xlu0 %v173, 16
    %v514 = vpop.permute.xlu0 %513
    %515 = vrot.lane.b32.xlu0 %v276, 16
    %v516 = vpop.permute.xlu0 %515
    %v519 = vmul.f32 %v485, %v514
    %v520 = vmul.f32 %v486, %v516
    %523 = vrot.lane.b32.xlu0 %v519, 112
    %v524 = vpop.permute.xlu0 %523
    %525 = vrot.lane.b32.xlu0 %v520, 112
    %v526 = vpop.permute.xlu0 %525
    %v529 = vadd.f32 %v509, %v524
    %v530 = vadd.f32 %v510, %v526
    %533 = vrot.lane.b32.xlu0 %v529, 16
    %v534 = vpop.permute.xlu0 %533
    %535 = vrot.lane.b32.xlu0 %v530, 16
    %v536 = vpop.permute.xlu0 %535
    %vm539 = vcmask 130048
    %v540 = vsel %vm539, %v507, %v534
    %v541 = vsel %vm539, %v508, %v536
    %vm542 = vcmask 261120
    %543 = vst.msk [vmem:[#allocation2] sm:$0xff] %vm542, %v540
    %544 = vst.msk [vmem:[#allocation2 + $0x8] sm:$0xff] %vm542, %v541
    // Predicated region
    $region14: #{tpu_custom_call.1} parent=1 // pred_check
      _
    $region15: #{tpu_custom_call.1} parent=1 // pred_check_branch
      %546 = sbr.rel (0) target = $region17
    $region16: #{tpu_custom_call.1} parent=1 // pred_region
      %s548 = ssub.s32 256, 256
      %549 = vsyncadd [#allocation3], %s548
      %s550 = sshll.u32 [#allocation2], 4
      %s551 = int_to_ptr.vmem [resolvable:$true] %s550
      %556 = dma.vmem_to_hbm [thread:$0]  %s551, 256, %s3, [#allocation3], 128, 128, 8
    $region17: #{tpu_custom_call.1} parent=1 // pred_fallthru
      _
    // Predicated region
    $region18: #{tpu_custom_call.1} parent=1 // pred_check
      _
    $region19: #{tpu_custom_call.1} parent=1 // pred_check_branch
      %558 = sbr.rel (0) target = $region21
    $region20: #{tpu_custom_call.1} parent=1 // pred_region
      %559 = dma.done [#allocation3], 256
    $region21: #{tpu_custom_call.1} parent=1 // pred_fallthru
      _
    %560 = vsyncpa [#allocation3], 1

</llo_original>
